<compile_context>
chip_gen: v5e
topology: v5e:2x2
jax: 0.10.0
libtpu: 0.0.40
codegen_flags: <defaults>
</compile_context>

<pallas_src>
import jax
import jax.numpy as jnp
from jax import lax
from jax.experimental import pallas as pl
from jax.experimental.pallas import tpu as pltpu

B = 2          # batch
L = 8          # options.max_length
BL = B * L     # batch folded into the sublane (M) axis
V = 128        # options.act_vocab_size (== full vocab here -> [..., :V] is a no-op)
D = 128        # options.embed_dim
TAU = 1.0      # options.tau
PAD_ID = 0     # options.t5_tokenizer.pad_token_id
IGNORE = -100

# meta field rows (each lane-broadcast to all 128 lanes): 0=rwrt_id,
# 1=rwrt_label, 2=ans_label, 3=attention, 4=shifted-passage id (-1 sentinel
# before the passage "starts").


# ------------------------- fused Pallas kernel -------------------------

def _end2end_kernel(meta_ref, gumbel_ref, w_emb_ref, w_emb_t_ref,
                    w_para_ref, w_rc_ref, stats_ref):
    # TODO(synk): each pretrained T5 encoder/decoder stack is proxied by
    # (embed ->) ReLU projection -> tied-embedding LM head -> token CE; the
    # full transformer has no clean in-kernel equivalent.
    # TODO(synk): forward-only; no custom_vjp, so the gumbel-softmax(hard=True)
    # straight-through gradient path is not implemented.

    # Metadata fields arrive pre-broadcast across lanes -> no XLU extraction.
    rwrt_id = meta_ref[0]        # (BL, 128) i32
    rwrt_lbl = meta_ref[1]
    ans_lbl = meta_ref[2]
    attn = meta_ref[3]
    psg_idx = meta_ref[4]

    w_emb = w_emb_ref[...]       # (V, D) bf16, embedding-lookup operand
    w_emb_t = w_emb_t_ref[...]   # (D, V) bf16, pre-transposed tied LM head
    lane_v = lax.broadcasted_iota(jnp.int32, (BL, V), 1)

    def lm(x_bf16, w_proj_ref, labels):
        # ReLU projection -> tied-embedding LM head -> token cross-entropy.
        # exp/log/CE stays f32; bf16 only at MXU operand boundaries (v5e-safe).
        h = jnp.maximum(
            jnp.dot(x_bf16, w_proj_ref[...],
                    preferred_element_type=jnp.float32), 0.0)       # (BL, D)
        logits = jnp.dot(h.astype(jnp.bfloat16), w_emb_t,
                         preferred_element_type=jnp.float32)        # (BL, V)
        lmax = jnp.max(logits, axis=-1, keepdims=True)
        lse = jnp.log(jnp.sum(jnp.exp(logits - lmax), axis=-1,
                              keepdims=True)) + lmax                # (BL, 1)
        lbl_oh = (lane_v == labels).astype(jnp.float32)             # -100 -> 0s
        lbl_logit = jnp.sum(logits * lbl_oh, axis=-1, keepdims=True)
        valid = (labels != IGNORE).astype(jnp.float32)              # (BL, 128)
        return logits, (lse - lbl_logit) * valid, valid

    # ---- embedding lookups (para input + shifted passage) in ONE matmul.
    # The passage embedding has no dependency on the para logits, so it is
    # hoisted off the serial para -> gumbel -> rc chain. ----
    rwrt_oh = (lane_v == rwrt_id).astype(jnp.bfloat16)              # (BL, V)
    psg_oh = (lane_v == psg_idx).astype(jnp.bfloat16)               # (BL, V)
    emb = jnp.dot(jnp.concatenate([rwrt_oh, psg_oh], axis=0), w_emb,
                  preferred_element_type=jnp.float32)               # (2BL, D)
    x_para = emb[:BL]
    psg_embed = emb[BL:]

    # ---- para model loss + logits ----
    logits, loss_p, valid_p = lm(x_para.astype(jnp.bfloat16), w_para_ref,
                                 rwrt_lbl)

    # ---- gumbel-softmax(hard=True) forward value: argmax one-hot.
    # f32 gumbel ties are measure-zero -> no explicit tie-break pass; the
    # attention mask is folded directly into the hard one-hot (mask applied
    # BEFORE adding the shifted passage, matching the reference order). ----
    z = (logits + gumbel_ref[...]) * (1.0 / TAU)
    is_max = z == jnp.max(z, axis=-1, keepdims=True)
    hard = (is_max & (attn != 0)).astype(jnp.bfloat16)              # (BL, V)

    # ---- rc model loss (its logits never leave VMEM) ----
    inputs_embeds = (jnp.dot(hard, w_emb, preferred_element_type=jnp.float32)
                     + psg_embed)                                   # (BL, D)
    _, loss_r, valid_r = lm(inputs_embeds.astype(jnp.bfloat16), w_rc_ref,
                            ans_lbl)

    # ---- mean-over-valid on the idle MXU instead of XLU sublane reduces:
    # pack per-token loss/valid into lanes 0/1 and contract the token axis
    # with a ones row vector (f32 acc). ----
    lane = lax.broadcasted_iota(jnp.int32, (BL, 128), 1)
    num_pk = (jnp.where(lane == 0, loss_p, 0.0) +
              jnp.where(lane == 1, loss_r, 0.0))                    # (BL, 128)
    den_pk = (jnp.where(lane == 0, valid_p, 0.0) +
              jnp.where(lane == 1, valid_r, 0.0))
    ones_row = jnp.full((1, BL), 1.0, jnp.float32)
    num = jnp.dot(ones_row, num_pk, preferred_element_type=jnp.float32)
    den = jnp.dot(ones_row, den_pk, preferred_element_type=jnp.float32)
    lane_o = lax.broadcasted_iota(jnp.int32, (1, 128), 1)
    # max(count, 1) diverges from torch only in the degenerate all-IGNORE case
    # (torch's mean CE would give NaN there).
    stats_ref[...] = jnp.where(lane_o < 2, num / jnp.maximum(den, 1.0), 0.0)


# ------------------------- wrapper -------------------------

def _fused_call(meta, gumbel, w_emb, w_emb_t, w_para, w_rc):
    # NOTE: resident full weights are fine at V=D=128. At real T5 vocab sizes
    # (V~32k) the tied LM head must stream w_emb over a trailing "arbitrary"
    # vocab axis with online logsumexp (never materialize (BL,V) f32 logits),
    # use 256-aligned tiles on v6e/v7x (128 on v5e), add a leading "parallel"
    # token-tile axis so v7x's two TensorCores share work, and optionally hold
    # w_emb as fp8 on v7x. Out of scope for this toy proxy.
    stats = pl.pallas_call(
        _end2end_kernel,
        out_shape=jax.ShapeDtypeStruct((1, 128), jnp.float32),
        grid=(1,),
        in_specs=[
            pl.BlockSpec((5, BL, 128), lambda i: (0, 0, 0)),   # meta (bcast)
            pl.BlockSpec((BL, V), lambda i: (0, 0)),           # gumbel noise
            pl.BlockSpec((V, D), lambda i: (0, 0)),            # w_emb
            pl.BlockSpec((D, V), lambda i: (0, 0)),            # w_emb^T (head)
            pl.BlockSpec((D, D), lambda i: (0, 0)),            # w_proj_para
            pl.BlockSpec((D, D), lambda i: (0, 0)),            # w_proj_rc
        ],
        out_specs=pl.BlockSpec((1, 128), lambda i: (0, 0)),
        compiler_params=pltpu.CompilerParams(
            dimension_semantics=("arbitrary",)),
        cost_estimate=pl.CostEstimate(
            flops=2 * 7 * BL * D * V,
            transcendentals=2 * BL * (V + 1),
            bytes_accessed=(4 * V * D * 2 + 5 * BL * 128 * 4
                            + BL * V * 4 + 128 * 4)),
    )(meta, gumbel, w_emb, w_emb_t, w_para, w_rc)
    return stats[0, 0], stats[0, 1]


@jax.jit
def end2end_forward(params, batch, gumbel_key):
    rwrt_input = batch["rwrt_input_ids"].astype(jnp.int32)
    rwrt_attention = batch["rwrt_attention_mask"].astype(jnp.int32)
    rwrt_label = jnp.where(batch["lbl_input_ids"] == PAD_ID, IGNORE,
                           batch["lbl_input_ids"]).astype(jnp.int32)
    ans_label = jnp.where(batch["ans_input_ids"] == PAD_ID, IGNORE,
                          batch["ans_input_ids"]).astype(jnp.int32)
    psg_input = jnp.roll(batch["psg_input_ids"].astype(jnp.int32), 1, axis=1)
    psg_input = psg_input.at[:, 0].set(1)

    # passage shifting glue: fliplr/invert mask, per-row right-roll
    # (roll_by_gather), "flag" logic == inclusive cummax of (token != 0).
    flipped = jnp.fliplr(rwrt_attention)
    flipped_mask = jnp.where(flipped == 0, 1, 0)
    extr_psg = flipped_mask * psg_input
    shifts = jnp.sum(rwrt_attention == 1, axis=1)               # (B,)
    col_idx = jnp.arange(L)[None, :]
    gather_idx = (col_idx - shifts[:, None]) % L
    trunc_psg = jnp.take_along_axis(extr_psg, gather_idx, axis=1)
    started = lax.cummax((trunc_psg != 0).astype(jnp.int32), axis=1) > 0
    psg_idx = jnp.where(started, trunc_psg, -1)                 # -1 -> zero row

    # lane-broadcast per-token int metadata -> one (5, B*L, 128) block (no
    # in-kernel lane-reduce extraction; ~40 KB extra DMA is free here).
    fields = jnp.stack([rwrt_input.reshape(-1), rwrt_label.reshape(-1),
                        ans_label.reshape(-1), rwrt_attention.reshape(-1),
                        psg_idx.reshape(-1)], axis=0).astype(jnp.int32)
    meta = jnp.broadcast_to(fields[:, :, None], (5, BL, 128))

    # gumbel noise drawn XLA-side (tiny (BL, V) f32 block) -> kernel stays
    # free of hardware-PRNG primitives (works on TPU and in interpret mode).
    gumbel = jax.random.gumbel(gumbel_key, (BL, V), jnp.float32)

    # bf16 matmul operands (f32 accumulation in-kernel); tied LM head gets a
    # pre-transposed copy so the kernel never transposes the (V, D) tile.
    w_emb = params["w_emb"].astype(jnp.bfloat16)
    w_emb_t = w_emb.T
    w_para = params["w_proj_para"].astype(jnp.bfloat16)
    w_rc = params["w_proj_rc"].astype(jnp.bfloat16)

    return _fused_call(meta, gumbel, w_emb, w_emb_t, w_para, w_rc)


if __name__ == "__main__":
    key = jax.random.PRNGKey(0)
    k_emb, k_pp, k_pr, k_data, k_gumbel = jax.random.split(key, 5)

    # Deterministic synthetic parameters (shapes implied by the module).
    params = {
        "w_emb": jax.random.normal(k_emb, (V, D), jnp.float32) * 0.02,
        "w_proj_para": jax.random.normal(k_pp, (D, D), jnp.float32) * 0.05,
        "w_proj_rc": jax.random.normal(k_pr, (D, D), jnp.float32) * 0.05,
    }

    kd1, kd2, kd3, kd4 = jax.random.split(k_data, 4)
    pos = jnp.arange(L)[None, :]
    rwrt_len = jnp.array([5, 3])
    rwrt_attention = (pos < rwrt_len[:, None]).astype(jnp.int32)
    rwrt_input = jax.random.randint(kd1, (B, L), 2, V) * rwrt_attention
    lbl = jax.random.randint(kd2, (B, L), 2, V) * (pos < jnp.array([4, 6])[:, None])
    psg = jax.random.randint(kd3, (B, L), 2, V) * (pos < jnp.array([6, 7])[:, None])
    ans = jax.random.randint(kd4, (B, L), 2, V) * (pos < jnp.array([3, 2])[:, None])

    batch = {
        "rwrt_input_ids": rwrt_input.astype(jnp.int32),
        "rwrt_attention_mask": rwrt_attention,
        "lbl_input_ids": lbl.astype(jnp.int32),
        "psg_input_ids": psg.astype(jnp.int32),
        "ans_input_ids": ans.astype(jnp.int32),
    }

    para_loss, rc_loss = end2end_forward(params, batch, k_gumbel)
    jax.block_until_ready((para_loss, rc_loss))
    assert jnp.isfinite(para_loss) and jnp.isfinite(rc_loss)
    print("KERNEL_OK")
</pallas_src>

<mosaic_0001>
module attributes {stable_mosaic.version = 11 : i64} {
  func.func @_end2end_kernel(%arg0: i32, %arg1: memref<5x16x128xi32, #tpu.memory_space<vmem>>, %arg2: memref<16x128xf32, #tpu.memory_space<vmem>>, %arg3: memref<128x128xbf16, #tpu.memory_space<vmem>>, %arg4: memref<128x128xbf16, #tpu.memory_space<vmem>>, %arg5: memref<128x128xbf16, #tpu.memory_space<vmem>>, %arg6: memref<128x128xbf16, #tpu.memory_space<vmem>>, %arg7: memref<1x128xf32, #tpu.memory_space<vmem>>) attributes {dimension_semantics = [#tpu.dimension_semantics<arbitrary>], iteration_bounds = array<i64: 1>, scalar_prefetch = 0 : i64, scratch_operands = 0 : i64, tpu.core_type = #tpu.core_type<tc>, window_params = [{pipeline_mode = #tpu.pipeline_mode<synchronous>, transform_indices = @transform_0, window_bounds = array<i64: 5, 16, 128>}, {pipeline_mode = #tpu.pipeline_mode<synchronous>, transform_indices = @transform_1, window_bounds = array<i64: 16, 128>}, {pipeline_mode = #tpu.pipeline_mode<synchronous>, transform_indices = @transform_2, window_bounds = array<i64: 128, 128>}, {pipeline_mode = #tpu.pipeline_mode<synchronous>, transform_indices = @transform_3, window_bounds = array<i64: 128, 128>}, {pipeline_mode = #tpu.pipeline_mode<synchronous>, transform_indices = @transform_4, window_bounds = array<i64: 128, 128>}, {pipeline_mode = #tpu.pipeline_mode<synchronous>, transform_indices = @transform_5, window_bounds = array<i64: 128, 128>}, {pipeline_mode = #tpu.pipeline_mode<synchronous>, transform_indices = @transform_6, window_bounds = array<i64: 1, 128>}]} {
    %c0 = arith.constant 0 : index
    %c0_0 = arith.constant 0 : index
    %c0_1 = arith.constant 0 : index
    %0 = vector.load %arg1[%c0, %c0_0, %c0_1] : memref<5x16x128xi32, #tpu.memory_space<vmem>>, vector<1x16x128xi32>
    %1 = vector.shape_cast %0 : vector<1x16x128xi32> to vector<16x128xi32>
    %c1 = arith.constant 1 : index
    %c0_2 = arith.constant 0 : index
    %c0_3 = arith.constant 0 : index
    %2 = vector.load %arg1[%c1, %c0_2, %c0_3] : memref<5x16x128xi32, #tpu.memory_space<vmem>>, vector<1x16x128xi32>
    %3 = vector.shape_cast %2 : vector<1x16x128xi32> to vector<16x128xi32>
    %c2 = arith.constant 2 : index
    %c0_4 = arith.constant 0 : index
    %c0_5 = arith.constant 0 : index
    %4 = vector.load %arg1[%c2, %c0_4, %c0_5] : memref<5x16x128xi32, #tpu.memory_space<vmem>>, vector<1x16x128xi32>
    %5 = vector.shape_cast %4 : vector<1x16x128xi32> to vector<16x128xi32>
    %c3 = arith.constant 3 : index
    %c0_6 = arith.constant 0 : index
    %c0_7 = arith.constant 0 : index
    %6 = vector.load %arg1[%c3, %c0_6, %c0_7] : memref<5x16x128xi32, #tpu.memory_space<vmem>>, vector<1x16x128xi32>
    %7 = vector.shape_cast %6 : vector<1x16x128xi32> to vector<16x128xi32>
    %c4 = arith.constant 4 : index
    %c0_8 = arith.constant 0 : index
    %c0_9 = arith.constant 0 : index
    %8 = vector.load %arg1[%c4, %c0_8, %c0_9] : memref<5x16x128xi32, #tpu.memory_space<vmem>>, vector<1x16x128xi32>
    %9 = vector.shape_cast %8 : vector<1x16x128xi32> to vector<16x128xi32>
    %c0_10 = arith.constant 0 : index
    %c0_11 = arith.constant 0 : index
    %10 = vector.load %arg3[%c0_10, %c0_11] : memref<128x128xbf16, #tpu.memory_space<vmem>>, vector<128x128xbf16>
    %c0_12 = arith.constant 0 : index
    %c0_13 = arith.constant 0 : index
    %11 = vector.load %arg4[%c0_12, %c0_13] : memref<128x128xbf16, #tpu.memory_space<vmem>>, vector<128x128xbf16>
    %12 = tpu.iota {dimensions = array<i32: 1>} : vector<16x128xi32>
    %13 = arith.cmpi eq, %12, %1 : vector<16x128xi32>
    %14 = arith.extui %13 : vector<16x128xi1> to vector<16x128xi32>
    %15 = arith.sitofp %14 : vector<16x128xi32> to vector<16x128xf32>
    %16 = arith.truncf %15 : vector<16x128xf32> to vector<16x128xbf16>
    %17 = arith.cmpi eq, %12, %9 : vector<16x128xi32>
    %18 = arith.extui %17 : vector<16x128xi1> to vector<16x128xi32>
    %19 = arith.sitofp %18 : vector<16x128xi32> to vector<16x128xf32>
    %20 = arith.truncf %19 : vector<16x128xf32> to vector<16x128xbf16>
    %21 = tpu.concatenate %16, %20 in 0 : vector<16x128xbf16>, vector<16x128xbf16> -> vector<32x128xbf16>
    %cst = arith.constant dense<0.000000e+00> : vector<32x128xf32>
    %22 = tpu.matmul %21, %10, %cst {dimension_numbers = #tpu.dot_dimension_numbers<[1], [0], [0], [1], [0, 0, 1, 1], [], []>} : vector<32x128xbf16>, vector<128x128xbf16>, vector<32x128xf32> -> vector<32x128xf32>
    %23 = vector.extract_strided_slice %22 {offsets = [0, 0], sizes = [16, 128], strides = [1, 1]} : vector<32x128xf32> to vector<16x128xf32>
    %24 = vector.extract_strided_slice %22 {offsets = [16, 0], sizes = [16, 128], strides = [1, 1]} : vector<32x128xf32> to vector<16x128xf32>
    %25 = arith.truncf %23 : vector<16x128xf32> to vector<16x128xbf16>
    %c0_14 = arith.constant 0 : index
    %c0_15 = arith.constant 0 : index
    %26 = vector.load %arg5[%c0_14, %c0_15] : memref<128x128xbf16, #tpu.memory_space<vmem>>, vector<128x128xbf16>
    %cst_16 = arith.constant dense<0.000000e+00> : vector<16x128xf32>
    %27 = tpu.matmul %25, %26, %cst_16 {dimension_numbers = #tpu.dot_dimension_numbers<[1], [0], [0], [1], [0, 0, 1, 1], [], []>} : vector<16x128xbf16>, vector<128x128xbf16>, vector<16x128xf32> -> vector<16x128xf32>
    %cst_17 = arith.constant 0.000000e+00 : f32
    %28 = vector.broadcast %cst_17 : f32 to vector<16x128xf32>
    %29 = arith.maximumf %27, %28 : vector<16x128xf32>
    %30 = arith.truncf %29 : vector<16x128xf32> to vector<16x128xbf16>
    %cst_18 = arith.constant dense<0.000000e+00> : vector<16x128xf32>
    %31 = tpu.matmul %30, %11, %cst_18 {dimension_numbers = #tpu.dot_dimension_numbers<[1], [0], [0], [1], [0, 0, 1, 1], [], []>} : vector<16x128xbf16>, vector<128x128xbf16>, vector<16x128xf32> -> vector<16x128xf32>
    %cst_19 = arith.constant dense<0xFF800000> : vector<16xf32>
    %32 = vector.multi_reduction <maximumf>, %31, %cst_19 [1] : vector<16x128xf32> to vector<16xf32>
    %33 = vector.shape_cast %32 : vector<16xf32> to vector<16x1xf32>
    %34 = vector.broadcast %33 : vector<16x1xf32> to vector<16x128xf32>
    %35 = arith.subf %31, %34 : vector<16x128xf32>
    %36 = math.exp %35 : vector<16x128xf32>
    %cst_20 = arith.constant dense<0.000000e+00> : vector<16xf32>
    %37 = vector.multi_reduction <add>, %36, %cst_20 [1] : vector<16x128xf32> to vector<16xf32>
    %38 = vector.shape_cast %37 : vector<16xf32> to vector<16x1xf32>
    %39 = math.log %38 : vector<16x1xf32>
    %40 = arith.addf %39, %33 : vector<16x1xf32>
    %41 = arith.cmpi eq, %12, %3 : vector<16x128xi32>
    %42 = arith.extui %41 : vector<16x128xi1> to vector<16x128xi32>
    %43 = arith.sitofp %42 : vector<16x128xi32> to vector<16x128xf32>
    %44 = arith.mulf %31, %43 : vector<16x128xf32>
    %cst_21 = arith.constant dense<0.000000e+00> : vector<16xf32>
    %45 = vector.multi_reduction <add>, %44, %cst_21 [1] : vector<16x128xf32> to vector<16xf32>
    %46 = vector.shape_cast %45 : vector<16xf32> to vector<16x1xf32>
    %c-100_i32 = arith.constant -100 : i32
    %47 = vector.broadcast %c-100_i32 : i32 to vector<16x128xi32>
    %48 = arith.cmpi ne, %3, %47 : vector<16x128xi32>
    %49 = arith.extui %48 : vector<16x128xi1> to vector<16x128xi32>
    %50 = arith.sitofp %49 : vector<16x128xi32> to vector<16x128xf32>
    %51 = arith.subf %40, %46 : vector<16x1xf32>
    %52 = vector.broadcast %51 : vector<16x1xf32> to vector<16x128xf32>
    %53 = arith.mulf %52, %50 : vector<16x128xf32>
    %c0_22 = arith.constant 0 : index
    %c0_23 = arith.constant 0 : index
    %54 = vector.load %arg2[%c0_22, %c0_23] : memref<16x128xf32, #tpu.memory_space<vmem>>, vector<16x128xf32>
    %55 = arith.addf %31, %54 : vector<16x128xf32>
    %cst_24 = arith.constant 1.000000e+00 : f32
    %56 = vector.broadcast %cst_24 : f32 to vector<16x128xf32>
    %57 = arith.mulf %55, %56 : vector<16x128xf32>
    %cst_25 = arith.constant dense<0xFF800000> : vector<16xf32>
    %58 = vector.multi_reduction <maximumf>, %57, %cst_25 [1] : vector<16x128xf32> to vector<16xf32>
    %59 = vector.shape_cast %58 : vector<16xf32> to vector<16x1xf32>
    %60 = vector.broadcast %59 : vector<16x1xf32> to vector<16x128xf32>
    %61 = arith.cmpf oeq, %57, %60 : vector<16x128xf32>
    %c0_i32 = arith.constant 0 : i32
    %62 = vector.broadcast %c0_i32 : i32 to vector<16x128xi32>
    %63 = arith.cmpi ne, %7, %62 : vector<16x128xi32>
    %64 = arith.andi %61, %63 : vector<16x128xi1>
    %65 = arith.extui %64 : vector<16x128xi1> to vector<16x128xi32>
    %66 = arith.sitofp %65 : vector<16x128xi32> to vector<16x128xf32>
    %67 = arith.truncf %66 : vector<16x128xf32> to vector<16x128xbf16>
    %cst_26 = arith.constant dense<0.000000e+00> : vector<16x128xf32>
    %68 = tpu.matmul %67, %10, %cst_26 {dimension_numbers = #tpu.dot_dimension_numbers<[1], [0], [0], [1], [0, 0, 1, 1], [], []>} : vector<16x128xbf16>, vector<128x128xbf16>, vector<16x128xf32> -> vector<16x128xf32>
    %69 = arith.addf %68, %24 : vector<16x128xf32>
    %70 = arith.truncf %69 : vector<16x128xf32> to vector<16x128xbf16>
    %c0_27 = arith.constant 0 : index
    %c0_28 = arith.constant 0 : index
    %71 = vector.load %arg6[%c0_27, %c0_28] : memref<128x128xbf16, #tpu.memory_space<vmem>>, vector<128x128xbf16>
    %cst_29 = arith.constant dense<0.000000e+00> : vector<16x128xf32>
    %72 = tpu.matmul %70, %71, %cst_29 {dimension_numbers = #tpu.dot_dimension_numbers<[1], [0], [0], [1], [0, 0, 1, 1], [], []>} : vector<16x128xbf16>, vector<128x128xbf16>, vector<16x128xf32> -> vector<16x128xf32>
    %cst_30 = arith.constant 0.000000e+00 : f32
    %73 = vector.broadcast %cst_30 : f32 to vector<16x128xf32>
    %74 = arith.maximumf %72, %73 : vector<16x128xf32>
    %75 = arith.truncf %74 : vector<16x128xf32> to vector<16x128xbf16>
    %cst_31 = arith.constant dense<0.000000e+00> : vector<16x128xf32>
    %76 = tpu.matmul %75, %11, %cst_31 {dimension_numbers = #tpu.dot_dimension_numbers<[1], [0], [0], [1], [0, 0, 1, 1], [], []>} : vector<16x128xbf16>, vector<128x128xbf16>, vector<16x128xf32> -> vector<16x128xf32>
    %cst_32 = arith.constant dense<0xFF800000> : vector<16xf32>
    %77 = vector.multi_reduction <maximumf>, %76, %cst_32 [1] : vector<16x128xf32> to vector<16xf32>
    %78 = vector.shape_cast %77 : vector<16xf32> to vector<16x1xf32>
    %79 = vector.broadcast %78 : vector<16x1xf32> to vector<16x128xf32>
    %80 = arith.subf %76, %79 : vector<16x128xf32>
    %81 = math.exp %80 : vector<16x128xf32>
    %cst_33 = arith.constant dense<0.000000e+00> : vector<16xf32>
    %82 = vector.multi_reduction <add>, %81, %cst_33 [1] : vector<16x128xf32> to vector<16xf32>
    %83 = vector.shape_cast %82 : vector<16xf32> to vector<16x1xf32>
    %84 = math.log %83 : vector<16x1xf32>
    %85 = arith.addf %84, %78 : vector<16x1xf32>
    %86 = arith.cmpi eq, %12, %5 : vector<16x128xi32>
    %87 = arith.extui %86 : vector<16x128xi1> to vector<16x128xi32>
    %88 = arith.sitofp %87 : vector<16x128xi32> to vector<16x128xf32>
    %89 = arith.mulf %76, %88 : vector<16x128xf32>
    %cst_34 = arith.constant dense<0.000000e+00> : vector<16xf32>
    %90 = vector.multi_reduction <add>, %89, %cst_34 [1] : vector<16x128xf32> to vector<16xf32>
    %91 = vector.shape_cast %90 : vector<16xf32> to vector<16x1xf32>
    %c-100_i32_35 = arith.constant -100 : i32
    %92 = vector.broadcast %c-100_i32_35 : i32 to vector<16x128xi32>
    %93 = arith.cmpi ne, %5, %92 : vector<16x128xi32>
    %94 = arith.extui %93 : vector<16x128xi1> to vector<16x128xi32>
    %95 = arith.sitofp %94 : vector<16x128xi32> to vector<16x128xf32>
    %96 = arith.subf %85, %91 : vector<16x1xf32>
    %97 = vector.broadcast %96 : vector<16x1xf32> to vector<16x128xf32>
    %98 = arith.mulf %97, %95 : vector<16x128xf32>
    %99 = tpu.iota {dimensions = array<i32: 1>} : vector<16x128xi32>
    %c0_i32_36 = arith.constant 0 : i32
    %100 = vector.broadcast %c0_i32_36 : i32 to vector<16x128xi32>
    %101 = arith.cmpi eq, %99, %100 : vector<16x128xi32>
    %cst_37 = arith.constant 0.000000e+00 : f32
    %102 = vector.broadcast %cst_37 : f32 to vector<16x128xf32>
    %103 = arith.select %101, %53, %102 : vector<16x128xi1>, vector<16x128xf32>
    %c1_i32 = arith.constant 1 : i32
    %104 = vector.broadcast %c1_i32 : i32 to vector<16x128xi32>
    %105 = arith.cmpi eq, %99, %104 : vector<16x128xi32>
    %cst_38 = arith.constant 0.000000e+00 : f32
    %106 = vector.broadcast %cst_38 : f32 to vector<16x128xf32>
    %107 = arith.select %105, %98, %106 : vector<16x128xi1>, vector<16x128xf32>
    %108 = arith.addf %103, %107 : vector<16x128xf32>
    %c0_i32_39 = arith.constant 0 : i32
    %109 = vector.broadcast %c0_i32_39 : i32 to vector<16x128xi32>
    %110 = arith.cmpi eq, %99, %109 : vector<16x128xi32>
    %cst_40 = arith.constant 0.000000e+00 : f32
    %111 = vector.broadcast %cst_40 : f32 to vector<16x128xf32>
    %112 = arith.select %110, %50, %111 : vector<16x128xi1>, vector<16x128xf32>
    %c1_i32_41 = arith.constant 1 : i32
    %113 = vector.broadcast %c1_i32_41 : i32 to vector<16x128xi32>
    %114 = arith.cmpi eq, %99, %113 : vector<16x128xi32>
    %cst_42 = arith.constant 0.000000e+00 : f32
    %115 = vector.broadcast %cst_42 : f32 to vector<16x128xf32>
    %116 = arith.select %114, %95, %115 : vector<16x128xi1>, vector<16x128xf32>
    %117 = arith.addf %112, %116 : vector<16x128xf32>
    %cst_43 = arith.constant 1.000000e+00 : f32
    %118 = vector.broadcast %cst_43 : f32 to vector<1x16xf32>
    %cst_44 = arith.constant dense<0.000000e+00> : vector<1x128xf32>
    %119 = tpu.matmul %118, %108, %cst_44 {dimension_numbers = #tpu.dot_dimension_numbers<[1], [0], [0], [1], [0, 0, 1, 1], [], []>} : vector<1x16xf32>, vector<16x128xf32>, vector<1x128xf32> -> vector<1x128xf32>
    %cst_45 = arith.constant dense<0.000000e+00> : vector<1x128xf32>
    %120 = tpu.matmul %118, %117, %cst_45 {dimension_numbers = #tpu.dot_dimension_numbers<[1], [0], [0], [1], [0, 0, 1, 1], [], []>} : vector<1x16xf32>, vector<16x128xf32>, vector<1x128xf32> -> vector<1x128xf32>
    %121 = tpu.iota {dimensions = array<i32: 1>} : vector<1x128xi32>
    %c2_i32 = arith.constant 2 : i32
    %122 = vector.broadcast %c2_i32 : i32 to vector<1x128xi32>
    %123 = arith.cmpi slt, %121, %122 : vector<1x128xi32>
    %cst_46 = arith.constant 1.000000e+00 : f32
    %124 = vector.broadcast %cst_46 : f32 to vector<1x128xf32>
    %125 = arith.maximumf %120, %124 : vector<1x128xf32>
    %126 = arith.divf %119, %125 : vector<1x128xf32>
    %cst_47 = arith.constant 0.000000e+00 : f32
    %127 = vector.broadcast %cst_47 : f32 to vector<1x128xf32>
    %128 = arith.select %123, %126, %127 : vector<1x128xi1>, vector<1x128xf32>
    %c0_48 = arith.constant 0 : index
    %c0_49 = arith.constant 0 : index
    %129 = vector.load %arg7[%c0_48, %c0_49] : memref<1x128xf32, #tpu.memory_space<vmem>>, vector<1x128xf32>
    tpu.vector_store %arg7[%c0_48, %c0_49], %128 {strides = array<i32>} : memref<1x128xf32, #tpu.memory_space<vmem>>, vector<1x128xf32>,
    return
  }
  func.func @transform_0(%arg0: i32) -> (i32, i32, i32) {
    %c0_i32 = arith.constant 0 : i32
    %c0_i32_0 = arith.constant 0 : i32
    %c0_i32_1 = arith.constant 0 : i32
    %c0_i32_2 = arith.constant 0 : i32
    return %c0_i32, %c0_i32_0, %c0_i32_1 : i32, i32, i32
  }
  func.func @transform_1(%arg0: i32) -> (i32, i32) {
    %c0_i32 = arith.constant 0 : i32
    %c0_i32_0 = arith.constant 0 : i32
    %c0_i32_1 = arith.constant 0 : i32
    return %c0_i32, %c0_i32_0 : i32, i32
  }
  func.func @transform_2(%arg0: i32) -> (i32, i32) {
    %c0_i32 = arith.constant 0 : i32
    %c0_i32_0 = arith.constant 0 : i32
    %c0_i32_1 = arith.constant 0 : i32
    return %c0_i32, %c0_i32_0 : i32, i32
  }
  func.func @transform_3(%arg0: i32) -> (i32, i32) {
    %c0_i32 = arith.constant 0 : i32
    %c0_i32_0 = arith.constant 0 : i32
    %c0_i32_1 = arith.constant 0 : i32
    return %c0_i32, %c0_i32_0 : i32, i32
  }
  func.func @transform_4(%arg0: i32) -> (i32, i32) {
    %c0_i32 = arith.constant 0 : i32
    %c0_i32_0 = arith.constant 0 : i32
    %c0_i32_1 = arith.constant 0 : i32
    return %c0_i32, %c0_i32_0 : i32, i32
  }
  func.func @transform_5(%arg0: i32) -> (i32, i32) {
    %c0_i32 = arith.constant 0 : i32
    %c0_i32_0 = arith.constant 0 : i32
    %c0_i32_1 = arith.constant 0 : i32
    return %c0_i32, %c0_i32_0 : i32, i32
  }
  func.func @transform_6(%arg0: i32) -> (i32, i32) {
    %c0_i32 = arith.constant 0 : i32
    %c0_i32_0 = arith.constant 0 : i32
    %c0_i32_1 = arith.constant 0 : i32
    return %c0_i32, %c0_i32_0 : i32, i32
  }
}

</mosaic_0001>

<llo_original>
// kernel: end2end_forward.1
$region0: #{end2end_forward.1}
  #allocation0 [shape = 'u32[]', space=smem, size = 0x4, offset = 0x4, fixed_abs, tag = 'smem constant byte address 0x4 - core index']
  #allocation1 [shape = 'u32[72,128]{1,0:T(1,128)}', space=vmem, size = 0x9000, scoped, tag = 'internal scratch']
  %s0 = inlined_call_operand.vmem [shape: s32[5,16,128], index: 0, kind: input, shape index: {}]
  %s1 = inlined_call_operand.vmem [shape: f32[16,128], index: 1, kind: input, shape index: {}]
  %s2 = inlined_call_operand.vmem [shape: bf16[128,128], index: 2, kind: input, shape index: {}]
  %s3 = inlined_call_operand.vmem [shape: bf16[128,128], index: 3, kind: input, shape index: {}]
  %s4 = inlined_call_operand.vmem [shape: bf16[128,128], index: 4, kind: input, shape index: {}]
  %s5 = inlined_call_operand.vmem [shape: bf16[128,128], index: 5, kind: input, shape index: {}]
  %s6 = inlined_call_operand.vmem [shape: f32[1,128], index: 6, kind: output, shape index: {}]
  %s7 = sld [smem:[#allocation0]]
  $region34: #{end2end_forward.1} parent=0
    _
  %s9 = ssub.s32 1, %s7
  %s10 = scalar_select 0, %s9, %s7
  // Predicated region
  $region2: #{end2end_forward.1} parent=0 // pred_check
    _
  $region3: #{end2end_forward.1} parent=0 // pred_check_branch
    %12 = sbr.rel (0) target = $region5
  $region4: #{end2end_forward.1} parent=0 // pred_region
    _
  $region5: #{end2end_forward.1} parent=0 // pred_fallthru
    _
  // Predicated region
  $region6: #{end2end_forward.1} parent=0 // pred_check
    _
  $region7: #{end2end_forward.1} parent=0 // pred_check_branch
    %14 = sbr.rel (0) target = $region9
  $region8: #{end2end_forward.1} parent=0 // pred_region
    _
  $region9: #{end2end_forward.1} parent=0 // pred_fallthru
    _
  // Predicated region
  $region10: #{end2end_forward.1} parent=0 // pred_check
    _
  $region11: #{end2end_forward.1} parent=0 // pred_check_branch
    %16 = sbr.rel (0) target = $region13
  $region12: #{end2end_forward.1} parent=0 // pred_region
    _
  $region13: #{end2end_forward.1} parent=0 // pred_fallthru
    _
  // Predicated region
  $region14: #{end2end_forward.1} parent=0 // pred_check
    _
  $region15: #{end2end_forward.1} parent=0 // pred_check_branch
    %18 = sbr.rel (0) target = $region17
  $region16: #{end2end_forward.1} parent=0 // pred_region
    _
  $region17: #{end2end_forward.1} parent=0 // pred_fallthru
    _
  // Predicated region
  $region18: #{end2end_forward.1} parent=0 // pred_check
    _
  $region19: #{end2end_forward.1} parent=0 // pred_check_branch
    %20 = sbr.rel (0) target = $region21
  $region20: #{end2end_forward.1} parent=0 // pred_region
    _
  $region21: #{end2end_forward.1} parent=0 // pred_fallthru
    _
  // Predicated region
  $region22: #{end2end_forward.1} parent=0 // pred_check
    _
  $region23: #{end2end_forward.1} parent=0 // pred_check_branch
    %22 = sbr.rel (0) target = $region25
  $region24: #{end2end_forward.1} parent=0 // pred_region
    _
  $region25: #{end2end_forward.1} parent=0 // pred_fallthru
    _
  %v23 = vld [vmem:[%s0] sm:$0xff]
  %v24 = vld [vmem:[%s0 + $0x8] sm:$0xff]
  %s25 = scalar_lea.vmem %s0, 16
  %v26 = vld [vmem:[%s25] sm:$0xff]
  %v27 = vld [vmem:[%s25 + $0x8] sm:$0xff]
  %s28 = scalar_lea.vmem %s0, 32
  %v29 = vld [vmem:[%s28] sm:$0xff]
  %v30 = vld [vmem:[%s28 + $0x8] sm:$0xff]
  %s31 = scalar_lea.vmem %s0, 48
  %v32 = vld [vmem:[%s31] sm:$0xff]
  %v33 = vld [vmem:[%s31 + $0x8] sm:$0xff]
  %s34 = scalar_lea.vmem %s0, 64
  %v35 = vld [vmem:[%s34] sm:$0xff]
  %v36 = vld [vmem:[%s34 + $0x8] sm:$0xff]
  %v37 = vld [vmem:[%s2] sm:$0xf]
  %v38 = vld [vmem:[%s2 + $0x4] sm:$0xf]
  %v39 = vld [vmem:[%s2 + $0x8] sm:$0xf]
  %v40 = vld [vmem:[%s2 + $0xc] sm:$0xf]
  %v41 = vld [vmem:[%s2 + $0x10] sm:$0xf]
  %v42 = vld [vmem:[%s2 + $0x14] sm:$0xf]
  %v43 = vld [vmem:[%s2 + $0x18] sm:$0xf]
  %v44 = vld [vmem:[%s2 + $0x1c] sm:$0xf]
  %v45 = vld [vmem:[%s2 + $0x20] sm:$0xf]
  %v46 = vld [vmem:[%s2 + $0x24] sm:$0xf]
  %v47 = vld [vmem:[%s2 + $0x28] sm:$0xf]
  %v48 = vld [vmem:[%s2 + $0x2c] sm:$0xf]
  %v49 = vld [vmem:[%s2 + $0x30] sm:$0xf]
  %v50 = vld [vmem:[%s2 + $0x34] sm:$0xf]
  %v51 = vld [vmem:[%s2 + $0x38] sm:$0xf]
  %v52 = vld [vmem:[%s2 + $0x3c] sm:$0xf]
  %v53 = vld [vmem:[%s3] sm:$0xf]
  %v54 = vld [vmem:[%s3 + $0x4] sm:$0xf]
  %v55 = vld [vmem:[%s3 + $0x8] sm:$0xf]
  %v56 = vld [vmem:[%s3 + $0xc] sm:$0xf]
  %v57 = vld [vmem:[%s3 + $0x10] sm:$0xf]
  %v58 = vld [vmem:[%s3 + $0x14] sm:$0xf]
  %v59 = vld [vmem:[%s3 + $0x18] sm:$0xf]
  %v60 = vld [vmem:[%s3 + $0x1c] sm:$0xf]
  %v61 = vld [vmem:[%s3 + $0x20] sm:$0xf]
  %v62 = vld [vmem:[%s3 + $0x24] sm:$0xf]
  %v63 = vld [vmem:[%s3 + $0x28] sm:$0xf]
  %v64 = vld [vmem:[%s3 + $0x2c] sm:$0xf]
  %v65 = vld [vmem:[%s3 + $0x30] sm:$0xf]
  %v66 = vld [vmem:[%s3 + $0x34] sm:$0xf]
  %v67 = vld [vmem:[%s3 + $0x38] sm:$0xf]
  %v68 = vld [vmem:[%s3 + $0x3c] sm:$0xf]
  %v69 = vlaneseq
  %v70 = vand.u32 %v69, 127
  %vm71 = vcmp.eq.s32.totalorder %v70, %v23
  %vm72 = vcmp.eq.s32.totalorder %v70, %v24
  %v73 = vsel %vm71, 1, 0
  %v74 = vsel %vm72, 1, 0
  %v75 = vcvt.s32.f32 %v73
  %v76 = vcvt.s32.f32 %v74
  %v77 = vpack.c.bf16 %v75, %v75
  %v78 = vpack.c.bf16 %v76, %v76
  %vm79 = vcmp.eq.s32.totalorder %v70, %v35
  %vm80 = vcmp.eq.s32.totalorder %v70, %v36
  %v81 = vsel %vm79, 1, 0
  %v82 = vsel %vm80, 1, 0
  %v83 = vcvt.s32.f32 %v81
  %v84 = vcvt.s32.f32 %v82
  %v85 = vpack.c.bf16 %v83, %v83
  %v86 = vpack.c.bf16 %v84, %v84
  %v89 = vunpack.c.l.b16 %v77
  %v90 = vunpack.c.l.b16 %v78
  %v91 = vpack.c.b16 %v90, %v89
  %v95 = vunpack.c.l.b16 %v85
  %v96 = vunpack.c.l.b16 %v86
  %v97 = vpack.c.b16 %v96, %v95
  %v115 = vunpack.c.l.b16 %v37
  %v116 = vunpack.c.l.b16 %v38
  %v117 = vunpack.c.l.b16 %v39
  %v118 = vunpack.c.l.b16 %v40
  %v119 = vunpack.c.l.b16 %v41
  %v120 = vunpack.c.l.b16 %v42
  %v121 = vunpack.c.l.b16 %v43
  %v122 = vunpack.c.l.b16 %v44
  %v123 = vunpack.c.l.b16 %v45
  %v124 = vunpack.c.l.b16 %v46
  %v125 = vunpack.c.l.b16 %v47
  %v126 = vunpack.c.l.b16 %v48
  %v127 = vunpack.c.l.b16 %v49
  %v128 = vunpack.c.l.b16 %v50
  %v129 = vunpack.c.l.b16 %v51
  %v130 = vunpack.c.l.b16 %v52
  %v131 = vpack.c.b16 %v116, %v115
  %v132 = vpack.c.b16 %v118, %v117
  %v133 = vpack.c.b16 %v120, %v119
  %v134 = vpack.c.b16 %v122, %v121
  %v135 = vpack.c.b16 %v124, %v123
  %v136 = vpack.c.b16 %v126, %v125
  %v137 = vpack.c.b16 %v128, %v127
  %v138 = vpack.c.b16 %v130, %v129
  %147 = vmatpush.bf16.msra.mxu0 %v138
  %148 = vmatpush.bf16.msra.mxu0 %v137
  %149 = vmatpush.bf16.msra.mxu0 %v136
  %150 = vmatpush.bf16.msra.mxu0 %v135
  %151 = vmatpush.bf16.msra.mxu0 %v134
  %152 = vmatpush.bf16.msra.mxu0 %v133
  %153 = vmatpush.bf16.msra.mxu0 %v132
  %154 = vmatpush.bf16.msra.mxu0 %v131
  %155 = vmatmul.bf16.gmra.mxu0 %v91
  %v156 = vpop.f32.mrf.mxu0
  %v157 = vadd.f32 0.0, %v156
  %v158 = vpop.f32.mrf.mxu0
  %v159 = vadd.f32 0.0, %v158
  %160 = vmatmul.bf16.gmra.mxu0 %v97
  %v161 = vpop.f32.mrf.mxu0
  %v162 = vadd.f32 0.0, %v161
  %v163 = vpop.f32.mrf.mxu0
  %v164 = vadd.f32 0.0, %v163
  %165 = vdwg.mxu0
  %v166 = vpack.c.bf16 %v159, %v157
  %v167 = vld [vmem:[%s4] sm:$0xf]
  %v168 = vld [vmem:[%s4 + $0x4] sm:$0xf]
  %v169 = vld [vmem:[%s4 + $0x8] sm:$0xf]
  %v170 = vld [vmem:[%s4 + $0xc] sm:$0xf]
  %v171 = vld [vmem:[%s4 + $0x10] sm:$0xf]
  %v172 = vld [vmem:[%s4 + $0x14] sm:$0xf]
  %v173 = vld [vmem:[%s4 + $0x18] sm:$0xf]
  %v174 = vld [vmem:[%s4 + $0x1c] sm:$0xf]
  %v175 = vld [vmem:[%s4 + $0x20] sm:$0xf]
  %v176 = vld [vmem:[%s4 + $0x24] sm:$0xf]
  %v177 = vld [vmem:[%s4 + $0x28] sm:$0xf]
  %v178 = vld [vmem:[%s4 + $0x2c] sm:$0xf]
  %v179 = vld [vmem:[%s4 + $0x30] sm:$0xf]
  %v180 = vld [vmem:[%s4 + $0x34] sm:$0xf]
  %v181 = vld [vmem:[%s4 + $0x38] sm:$0xf]
  %v182 = vld [vmem:[%s4 + $0x3c] sm:$0xf]
  %v199 = vunpack.c.l.b16 %v167
  %v200 = vunpack.c.l.b16 %v168
  %v201 = vunpack.c.l.b16 %v169
  %v202 = vunpack.c.l.b16 %v170
  %v203 = vunpack.c.l.b16 %v171
  %v204 = vunpack.c.l.b16 %v172
  %v205 = vunpack.c.l.b16 %v173
  %v206 = vunpack.c.l.b16 %v174
  %v207 = vunpack.c.l.b16 %v175
  %v208 = vunpack.c.l.b16 %v176
  %v209 = vunpack.c.l.b16 %v177
  %v210 = vunpack.c.l.b16 %v178
  %v211 = vunpack.c.l.b16 %v179
  %v212 = vunpack.c.l.b16 %v180
  %v213 = vunpack.c.l.b16 %v181
  %v214 = vunpack.c.l.b16 %v182
  %v215 = vpack.c.b16 %v200, %v199
  %v216 = vpack.c.b16 %v202, %v201
  %v217 = vpack.c.b16 %v204, %v203
  %v218 = vpack.c.b16 %v206, %v205
  %v219 = vpack.c.b16 %v208, %v207
  %v220 = vpack.c.b16 %v210, %v209
  %v221 = vpack.c.b16 %v212, %v211
  %v222 = vpack.c.b16 %v214, %v213
  %231 = vmatpush.bf16.msra.mxu0 %v222
  %232 = vmatpush.bf16.msra.mxu0 %v221
  %233 = vmatpush.bf16.msra.mxu0 %v220
  %234 = vmatpush.bf16.msra.mxu0 %v219
  %235 = vmatpush.bf16.msra.mxu0 %v218
  %236 = vmatpush.bf16.msra.mxu0 %v217
  %237 = vmatpush.bf16.msra.mxu0 %v216
  %238 = vmatpush.bf16.msra.mxu0 %v215
  %239 = vmatmul.bf16.gmra.mxu0 %v166
  %v240 = vpop.f32.mrf.mxu0
  %v241 = vadd.f32 0.0, %v240
  %v242 = vpop.f32.mrf.mxu0
  %v243 = vadd.f32 0.0, %v242
  %244 = vdwg.mxu0
  %v245 = vmax.f32 %v241, 0.0
  %v246 = vmax.f32 %v243, 0.0
  %v247 = vpack.c.bf16 %v246, %v245
  %v264 = vunpack.c.l.b16 %v53
  %v265 = vunpack.c.l.b16 %v54
  %v266 = vunpack.c.l.b16 %v55
  %v267 = vunpack.c.l.b16 %v56
  %v268 = vunpack.c.l.b16 %v57
  %v269 = vunpack.c.l.b16 %v58
  %v270 = vunpack.c.l.b16 %v59
  %v271 = vunpack.c.l.b16 %v60
  %v272 = vunpack.c.l.b16 %v61
  %v273 = vunpack.c.l.b16 %v62
  %v274 = vunpack.c.l.b16 %v63
  %v275 = vunpack.c.l.b16 %v64
  %v276 = vunpack.c.l.b16 %v65
  %v277 = vunpack.c.l.b16 %v66
  %v278 = vunpack.c.l.b16 %v67
  %v279 = vunpack.c.l.b16 %v68
  %v280 = vpack.c.b16 %v265, %v264
  %v281 = vpack.c.b16 %v267, %v266
  %v282 = vpack.c.b16 %v269, %v268
  %v283 = vpack.c.b16 %v271, %v270
  %v284 = vpack.c.b16 %v273, %v272
  %v285 = vpack.c.b16 %v275, %v274
  %v286 = vpack.c.b16 %v277, %v276
  %v287 = vpack.c.b16 %v279, %v278
  %296 = vmatpush.bf16.msra.mxu0 %v287
  %297 = vmatpush.bf16.msra.mxu0 %v286
  %298 = vmatpush.bf16.msra.mxu0 %v285
  %299 = vmatpush.bf16.msra.mxu0 %v284
  %300 = vmatpush.bf16.msra.mxu0 %v283
  %301 = vmatpush.bf16.msra.mxu0 %v282
  %302 = vmatpush.bf16.msra.mxu0 %v281
  %303 = vmatpush.bf16.msra.mxu0 %v280
  %304 = vmatmul.bf16.gmra.mxu0 %v247
  %v305 = vpop.f32.mrf.mxu0
  %v306 = vadd.f32 0.0, %v305
  %v307 = vpop.f32.mrf.mxu0
  %v308 = vadd.f32 0.0, %v307
  %309 = vdwg.mxu0
  %310 = vmax.xlane.f32.xlu0 %v306
  %v311 = vpop.xlane.xlu0 %310
  %312 = vmax.xlane.f32.xlu0 %v308
  %v313 = vpop.xlane.xlu0 %312
  %v314 = vsub.f32 %v306, %v311
  %v315 = vsub.f32 %v308, %v313
  %v316 = vmul.f32 %v314, 1.442695
  %v317 = vpow.pop %v316
  %v318 = vmul.f32 %v315, 1.442695
  %v319 = vpow.pop %v318
  %320 = vadd.xlane.f32.xlu0 %v317
  %v321 = vpop.xlane.xlu0 %320
  %322 = vadd.xlane.f32.xlu0 %v319
  %v323 = vpop.xlane.xlu0 %322
  %v324 = vlog2.pop %v321
  %v325 = vmul.f32 %v324, 0.6931472
  %v326 = vlog2.pop %v323
  %v327 = vmul.f32 %v326, 0.6931472
  %v328 = vadd.f32 %v325, %v311
  %v329 = vadd.f32 %v327, %v313
  %vm330 = vcmp.eq.s32.totalorder %v70, %v26
  %vm331 = vcmp.eq.s32.totalorder %v70, %v27
  %v332 = vsel %vm330, 1, 0
  %v333 = vsel %vm331, 1, 0
  %v334 = vcvt.s32.f32 %v332
  %v335 = vcvt.s32.f32 %v333
  %v336 = vmul.f32 %v306, %v334
  %v337 = vmul.f32 %v308, %v335
  %338 = vadd.xlane.f32.xlu0 %v336
  %v339 = vpop.xlane.xlu0 %338
  %340 = vadd.xlane.f32.xlu0 %v337
  %v341 = vpop.xlane.xlu0 %340
  %vm342 = vcmp.ne.s32.totalorder %v26, 4294967196
  %vm343 = vcmp.ne.s32.totalorder %v27, 4294967196
  %v344 = vsel %vm342, 1, 0
  %v345 = vsel %vm343, 1, 0
  %v346 = vcvt.s32.f32 %v344
  %v347 = vcvt.s32.f32 %v345
  %v348 = vsub.f32 %v328, %v339
  %v349 = vsub.f32 %v329, %v341
  %v350 = vmul.f32 %v348, %v346
  %v351 = vmul.f32 %v349, %v347
  %v352 = vld [vmem:[%s1] sm:$0xff]
  %v353 = vld [vmem:[%s1 + $0x8] sm:$0xff]
  %v354 = vadd.f32 %v306, %v352
  %v355 = vadd.f32 %v308, %v353
  %356 = vmax.xlane.f32.xlu0 %v354
  %v357 = vpop.xlane.xlu0 %356
  %358 = vmax.xlane.f32.xlu0 %v355
  %v359 = vpop.xlane.xlu0 %358
  %vm360 = vcmp.eq.f32.partialorder %v354, %v357
  %vm361 = vcmp.eq.f32.partialorder %v355, %v359
  %vm362 = vcmp.ne.s32.totalorder %v32, 0
  %vm363 = vcmp.ne.s32.totalorder %v33, 0
  %vm364 = vmand %vm360, %vm362
  %vm365 = vmand %vm361, %vm363
  %v366 = vsel %vm364, 1, 0
  %v367 = vsel %vm365, 1, 0
  %v368 = vcvt.s32.f32 %v366
  %v369 = vcvt.s32.f32 %v367
  %v370 = vpack.c.bf16 %v369, %v368
  %371 = vmatpush.bf16.msra.mxu0 %v138
  %372 = vmatpush.bf16.msra.mxu0 %v137
  %373 = vmatpush.bf16.msra.mxu0 %v136
  %374 = vmatpush.bf16.msra.mxu0 %v135
  %375 = vmatpush.bf16.msra.mxu0 %v134
  %376 = vmatpush.bf16.msra.mxu0 %v133
  %377 = vmatpush.bf16.msra.mxu0 %v132
  %378 = vmatpush.bf16.msra.mxu0 %v131
  %379 = vmatmul.bf16.gmra.mxu0 %v370
  %v380 = vpop.f32.mrf.mxu0
  %v381 = vadd.f32 %v162, %v380
  %v382 = vpop.f32.mrf.mxu0
  %v383 = vadd.f32 %v164, %v382
  %384 = vdwg.mxu0
  %v385 = vpack.c.bf16 %v383, %v381
  %v386 = vld [vmem:[%s5] sm:$0xf]
  %v387 = vld [vmem:[%s5 + $0x4] sm:$0xf]
  %v388 = vld [vmem:[%s5 + $0x8] sm:$0xf]
  %v389 = vld [vmem:[%s5 + $0xc] sm:$0xf]
  %v390 = vld [vmem:[%s5 + $0x10] sm:$0xf]
  %v391 = vld [vmem:[%s5 + $0x14] sm:$0xf]
  %v392 = vld [vmem:[%s5 + $0x18] sm:$0xf]
  %v393 = vld [vmem:[%s5 + $0x1c] sm:$0xf]
  %v394 = vld [vmem:[%s5 + $0x20] sm:$0xf]
  %v395 = vld [vmem:[%s5 + $0x24] sm:$0xf]
  %v396 = vld [vmem:[%s5 + $0x28] sm:$0xf]
  %v397 = vld [vmem:[%s5 + $0x2c] sm:$0xf]
  %v398 = vld [vmem:[%s5 + $0x30] sm:$0xf]
  %v399 = vld [vmem:[%s5 + $0x34] sm:$0xf]
  %v400 = vld [vmem:[%s5 + $0x38] sm:$0xf]
  %v401 = vld [vmem:[%s5 + $0x3c] sm:$0xf]
  %v418 = vunpack.c.l.b16 %v386
  %v419 = vunpack.c.l.b16 %v387
  %v420 = vunpack.c.l.b16 %v388
  %v421 = vunpack.c.l.b16 %v389
  %v422 = vunpack.c.l.b16 %v390
  %v423 = vunpack.c.l.b16 %v391
  %v424 = vunpack.c.l.b16 %v392
  %v425 = vunpack.c.l.b16 %v393
  %v426 = vunpack.c.l.b16 %v394
  %v427 = vunpack.c.l.b16 %v395
  %v428 = vunpack.c.l.b16 %v396
  %v429 = vunpack.c.l.b16 %v397
  %v430 = vunpack.c.l.b16 %v398
  %v431 = vunpack.c.l.b16 %v399
  %v432 = vunpack.c.l.b16 %v400
  %v433 = vunpack.c.l.b16 %v401
  %v434 = vpack.c.b16 %v419, %v418
  %v435 = vpack.c.b16 %v421, %v420
  %v436 = vpack.c.b16 %v423, %v422
  %v437 = vpack.c.b16 %v425, %v424
  %v438 = vpack.c.b16 %v427, %v426
  %v439 = vpack.c.b16 %v429, %v428
  %v440 = vpack.c.b16 %v431, %v430
  %v441 = vpack.c.b16 %v433, %v432
  %450 = vmatpush.bf16.msra.mxu0 %v441
  %451 = vmatpush.bf16.msra.mxu0 %v440
  %452 = vmatpush.bf16.msra.mxu0 %v439
  %453 = vmatpush.bf16.msra.mxu0 %v438
  %454 = vmatpush.bf16.msra.mxu0 %v437
  %455 = vmatpush.bf16.msra.mxu0 %v436
  %456 = vmatpush.bf16.msra.mxu0 %v435
  %457 = vmatpush.bf16.msra.mxu0 %v434
  %458 = vmatmul.bf16.gmra.mxu0 %v385
  %v459 = vpop.f32.mrf.mxu0
  %v460 = vadd.f32 0.0, %v459
  %v461 = vpop.f32.mrf.mxu0
  %v462 = vadd.f32 0.0, %v461
  %463 = vdwg.mxu0
  %v464 = vmax.f32 %v460, 0.0
  %v465 = vmax.f32 %v462, 0.0
  %v466 = vpack.c.bf16 %v465, %v464
  %467 = vmatpush.bf16.msra.mxu0 %v287
  %468 = vmatpush.bf16.msra.mxu0 %v286
  %469 = vmatpush.bf16.msra.mxu0 %v285
  %470 = vmatpush.bf16.msra.mxu0 %v284
  %471 = vmatpush.bf16.msra.mxu0 %v283
  %472 = vmatpush.bf16.msra.mxu0 %v282
  %473 = vmatpush.bf16.msra.mxu0 %v281
  %474 = vmatpush.bf16.msra.mxu0 %v280
  %475 = vmatmul.bf16.gmra.mxu0 %v466
  %v476 = vpop.f32.mrf.mxu0
  %v477 = vadd.f32 0.0, %v476
  %v478 = vpop.f32.mrf.mxu0
  %v479 = vadd.f32 0.0, %v478
  %480 = vdwg.mxu0
  %481 = vmax.xlane.f32.xlu0 %v477
  %v482 = vpop.xlane.xlu0 %481
  %483 = vmax.xlane.f32.xlu0 %v479
  %v484 = vpop.xlane.xlu0 %483
  %v485 = vsub.f32 %v477, %v482
  %v486 = vsub.f32 %v479, %v484
  %v487 = vmul.f32 %v485, 1.442695
  %v488 = vpow.pop %v487
  %v489 = vmul.f32 %v486, 1.442695
  %v490 = vpow.pop %v489
  %491 = vadd.xlane.f32.xlu0 %v488
  %v492 = vpop.xlane.xlu0 %491
  %493 = vadd.xlane.f32.xlu0 %v490
  %v494 = vpop.xlane.xlu0 %493
  %v495 = vlog2.pop %v492
  %v496 = vmul.f32 %v495, 0.6931472
  %v497 = vlog2.pop %v494
  %v498 = vmul.f32 %v497, 0.6931472
  %v499 = vadd.f32 %v496, %v482
  %v500 = vadd.f32 %v498, %v484
  %vm501 = vcmp.eq.s32.totalorder %v70, %v29
  %vm502 = vcmp.eq.s32.totalorder %v70, %v30
  %v503 = vsel %vm501, 1, 0
  %v504 = vsel %vm502, 1, 0
  %v505 = vcvt.s32.f32 %v503
  %v506 = vcvt.s32.f32 %v504
  %v507 = vmul.f32 %v477, %v505
  %v508 = vmul.f32 %v479, %v506
  %509 = vadd.xlane.f32.xlu0 %v507
  %v510 = vpop.xlane.xlu0 %509
  %511 = vadd.xlane.f32.xlu0 %v508
  %v512 = vpop.xlane.xlu0 %511
  %vm513 = vcmp.ne.s32.totalorder %v29, 4294967196
  %vm514 = vcmp.ne.s32.totalorder %v30, 4294967196
  %v515 = vsel %vm513, 1, 0
  %v516 = vsel %vm514, 1, 0
  %v517 = vcvt.s32.f32 %v515
  %v518 = vcvt.s32.f32 %v516
  %v519 = vsub.f32 %v499, %v510
  %v520 = vsub.f32 %v500, %v512
  %v521 = vmul.f32 %v519, %v517
  %v522 = vmul.f32 %v520, %v518
  %vm523 = vcmp.eq.s32.totalorder %v70, 0
  %v524 = vsel %vm523, %v350, 0.0
  %v525 = vsel %vm523, %v351, 0.0
  %vm526 = vcmp.eq.s32.totalorder %v70, 1
  %v527 = vsel %vm526, %v521, 0.0
  %v528 = vsel %vm526, %v522, 0.0
  %v529 = vadd.f32 %v524, %v527
  %v530 = vadd.f32 %v525, %v528
  %v531 = vsel %vm523, %v346, 0.0
  %v532 = vsel %vm523, %v347, 0.0
  %v533 = vsel %vm526, %v517, 0.0
  %v534 = vsel %vm526, %v518, 0.0
  %v535 = vadd.f32 %v531, %v533
  %v536 = vadd.f32 %v532, %v534
  %vm537 = vcmask 130048
  %v539 = vsel %vm537, 1.0, 0
  %541 = vmatpush.msra.mxu0 0.0
  %542 = vmatpush.msra.mxu0 0.0
  %543 = vmatpush.msra.mxu0 0.0
  %544 = vmatpush.msra.mxu0 0.0
  %545 = vmatpush.msra.mxu0 0.0
  %546 = vmatpush.msra.mxu0 0.0
  %547 = vmatpush.msra.mxu0 0.0
  %548 = vmatpush.msra.mxu0 0.0
  %549 = vmatpush.msra.mxu0 0.0
  %550 = vmatpush.msra.mxu0 0.0
  %551 = vmatpush.msra.mxu0 0.0
  %552 = vmatpush.msra.mxu0 0.0
  %553 = vmatpush.msra.mxu0 0.0
  %554 = vmatpush.msra.mxu0 0.0
  %555 = vmatpush.msra.mxu0 %v530
  %556 = vmatpush.msra.mxu0 %v529
  %557 = vmatmul.f32.gmra.mxu0 %v539
  %v558 = vpop.f32.mrf.mxu0
  %v559 = vadd.f32 0.0, %v558
  %560 = vdwg.mxu0
  %561 = vmatpush.msra.mxu0 0.0
  %562 = vmatpush.msra.mxu0 0.0
  %563 = vmatpush.msra.mxu0 0.0
  %564 = vmatpush.msra.mxu0 0.0
  %565 = vmatpush.msra.mxu0 0.0
  %566 = vmatpush.msra.mxu0 0.0
  %567 = vmatpush.msra.mxu0 0.0
  %568 = vmatpush.msra.mxu0 0.0
  %569 = vmatpush.msra.mxu0 0.0
  %570 = vmatpush.msra.mxu0 0.0
  %571 = vmatpush.msra.mxu0 0.0
  %572 = vmatpush.msra.mxu0 0.0
  %573 = vmatpush.msra.mxu0 0.0
  %574 = vmatpush.msra.mxu0 0.0
  %575 = vmatpush.msra.mxu0 %v536
  %576 = vmatpush.msra.mxu0 %v535
  %577 = vmatmul.f32.gmra.mxu0 %v539
  %v578 = vpop.f32.mrf.mxu0
  %v579 = vadd.f32 0.0, %v578
  %580 = vdwg.mxu0
  %vm581 = vcmp.lt.s32.totalorder %v70, 2
  %v582 = vmax.f32 %v579, 1.0
  %v583 = vrcp.pop %v582
  %v584 = vmul.f32 %v582, %v583
  %v585 = vsub.f32 1.0, %v584
  %v586 = vmul.f32 %v583, %v585
  %v587 = vadd.f32 %v583, %v586
  %vm588 = vweird.f32 %v582
  %vm589 = vweird.f32 %v583
  %vm590 = vmor %vm588, %vm589
  %v591 = vsel %vm590, %v583, %v587
  %v592 = vand.u32 2147483647, %v582
  %vm593 = vcmp.eq.f32.partialorder %v592, 8.507059e+37
  %v594 = vand.u32 %v582, 2147483648
  %v595 = vor.u32 1.1754944e-38, %v594
  %v596 = vsel %vm593, %v595, %v591
  %v597 = vmul.f32 %v559, %v596
  %v598 = vsel %vm581, %v597, 0.0
  %599 = vst [vmem:[%s6] sm:$0x1] %v598
  // Predicated region
  $region26: #{end2end_forward.1} parent=0 // pred_check
    _
  $region27: #{end2end_forward.1} parent=0 // pred_check_branch
    %601 = sbr.rel (0) target = $region29
  $region28: #{end2end_forward.1} parent=0 // pred_region
    _
  $region29: #{end2end_forward.1} parent=0 // pred_fallthru
    _
  // Predicated region
  $region30: #{end2end_forward.1} parent=0 // pred_check
    _
  $region31: #{end2end_forward.1} parent=0 // pred_check_branch
    %603 = sbr.rel (0) target = $region33
  $region32: #{end2end_forward.1} parent=0 // pred_region
    _
  $region33: #{end2end_forward.1} parent=0 // pred_fallthru
    _

</llo_original>
